<compile_context>
chip_gen: v7x
topology: tpu7x:2x2x1
jax: 0.10.0
libtpu: 0.0.40
codegen_flags: <defaults>
</compile_context>

<pallas_src>
import math

import jax
import jax.numpy as jnp
from jax import lax
from jax.experimental import pallas as pl
from jax.experimental.pallas import tpu as pltpu

EPSILON = 1e-8
_INV_2SQRT3 = 1.0 / (2.0 * math.sqrt(3.0))


# ---------------------------------------------------------------------------
# Fused kernel: radial MLP (MXU) + distance mask + Y_2 + contraction over b.
# ---------------------------------------------------------------------------
def _filter0_out2_kernel(rbf_ref, uv_ref, l_ref, w1_ref, b1_ref, w2_ref, b2_ref, o_ref):
    """
    rbf_ref : [M, Din]   flattened rbf_inputs   (M = Na * Nb)
    uv_ref  : [M, 3]     flattened unit_vectors
    l_ref   : [Nb, F]    layer_input[..., 0]
    w1_ref  : [H, Din], b1_ref: [1, H], w2_ref: [F, H], b2_ref: [1, F]
    o_ref   : [Na, F*5]  lane-dense output slab, o[a, f*5 + i]
    """
    M = rbf_ref.shape[0]
    Nb, Fdim = l_ref.shape
    Na = M // Nb

    # --- RadialFunction MLP on the MXU: relu(x @ W1^T + b1) @ W2^T + b2 ---
    # Contract the last dim of both operands -> x @ W^T without any wrapper transpose.
    dn = (((1,), (1,)), ((), ()))
    h = lax.dot_general(rbf_ref[...], w1_ref[...], dn, preferred_element_type=jnp.float32)
    h = jnp.maximum(h + b1_ref[...], 0.0)
    radial = lax.dot_general(h, w2_ref[...], dn, preferred_element_type=jnp.float32)
    radial = radial + b2_ref[...]                                # [M, F]

    # --- geometry: distance mask + degree-2 real spherical harmonics ---
    # TODO(synk): Y_2 was not defined in the provided spec; the canonical TFN Y_2 is used.
    uv = uv_ref[...]                                             # [M, 3]
    x = uv[:, 0:1]
    y = uv[:, 1:2]
    z = uv[:, 2:3]
    r2 = x * x + y * y + z * z                                   # [M, 1]
    dij = jnp.sqrt(r2)
    radial = jnp.where(dij < EPSILON, 0.0, radial)               # masked_radial  [M, F]

    inv = 1.0 / jnp.maximum(r2, EPSILON)
    y2 = jnp.concatenate(
        [
            x * y * inv,
            y * z * inv,
            (2.0 * z * z - x * x - y * y) * (inv * _INV_2SQRT3),
            z * x * inv,
            (x * x - y * y) * (0.5 * inv),
        ],
        axis=1,
    )                                                            # [M, 5]

    # --- contraction over b:  out[a, f*5+i] = sum_b radial[a,b,f] * L[b,f] * y2[a,b,i] ---
    radial3 = radial.reshape(Na, Nb, Fdim)                       # [a, b, f] (layout-preserving split)
    t3 = radial3 * l_ref[...][None, :, :]                        # fold layer_input (k == 1)
    y2_3 = y2.reshape(Na, Nb, 5)                                 # [a, b, i]
    q = jnp.concatenate(
        [t3[:, :, f:f + 1] * y2_3 for f in range(Fdim)], axis=-1
    )                                                            # [a, b, F*5]
    o_ref[...] = jnp.sum(q, axis=1)                              # [a, F*5]  -- single store


# ---------------------------------------------------------------------------
# Wrapper: only free (contiguous) reshapes around a single pallas_call.
# ---------------------------------------------------------------------------
def filter_0_output_2(layer_input, rbf_inputs, unit_vectors, w1, b1, w2, b2):
    """
    layer_input : [Nb, F, 1]   (cg = eye(5).unsqueeze(-1) forces last dim == 1)
    rbf_inputs  : [Na, Nb, Din]
    unit_vectors: [Na, Nb, 3]
    returns     : [Na, F, 5]   (einsum 'afi')
    """
    Na, Nb, Din = rbf_inputs.shape
    H = w1.shape[0]
    Fdim = w2.shape[0]
    M = Na * Nb

    # torch: layer_input.view(-1, size(-2), size(-1))
    l3 = layer_input.reshape(-1, layer_input.shape[-2], layer_input.shape[-1])
    assert l3.shape == (Nb, Fdim, 1), l3.shape
    l2 = l3.reshape(Nb, Fdim)

    rbf_2d = rbf_inputs.reshape(M, Din)
    uv_2d = unit_vectors.reshape(M, 3)

    out2d = pl.pallas_call(
        _filter0_out2_kernel,
        out_shape=jax.ShapeDtypeStruct((Na, Fdim * 5), jnp.float32),
        grid=(1,),
        in_specs=[
            pl.BlockSpec((M, Din), lambda i: (0, 0)),
            pl.BlockSpec((M, 3), lambda i: (0, 0)),
            pl.BlockSpec((Nb, Fdim), lambda i: (0, 0)),
            pl.BlockSpec((H, Din), lambda i: (0, 0)),
            pl.BlockSpec((1, H), lambda i: (0, 0)),
            pl.BlockSpec((Fdim, H), lambda i: (0, 0)),
            pl.BlockSpec((1, Fdim), lambda i: (0, 0)),
        ],
        out_specs=pl.BlockSpec((Na, Fdim * 5), lambda i: (0, 0)),
        compiler_params=pltpu.CompilerParams(dimension_semantics=("arbitrary",)),
    )(rbf_2d, uv_2d, l2, w1, b1.reshape(1, H), w2, b2.reshape(1, Fdim))

    return out2d.reshape(Na, Fdim, 5)


# ---------------------------------------------------------------------------
# Deterministic init + pure-JAX reference
# ---------------------------------------------------------------------------
def xavier_uniform(key, shape):
    fan_out, fan_in = shape
    bound = math.sqrt(6.0 / (fan_in + fan_out))
    return jax.random.uniform(key, shape, jnp.float32, minval=-bound, maxval=bound)


def y_2_ref(rij):
    x = rij[..., 0]
    y = rij[..., 1]
    z = rij[..., 2]
    r2 = jnp.maximum(jnp.sum(rij * rij, axis=-1), EPSILON)
    return jnp.stack(
        [
            x * y / r2,
            y * z / r2,
            (-x * x - y * y + 2.0 * z * z) / (2.0 * math.sqrt(3.0) * r2),
            z * x / r2,
            (x * x - y * y) / (2.0 * r2),
        ],
        axis=-1,
    )


if __name__ == "__main__":
    N = 8      # points (einsum indices a, b)
    Din = 32   # rbf feature dim (RadialFunction input_dim)
    H = 32     # hidden_dim (defaults to input_dim)
    Fdim = 4   # output_dim (einsum index f)

    key = jax.random.PRNGKey(0)
    k1, k2, k3, k4, k5 = jax.random.split(key, 5)

    w1 = xavier_uniform(k1, (H, Din))
    b1 = jnp.zeros((H,), jnp.float32)
    w2 = xavier_uniform(k2, (Fdim, H))
    b2 = jnp.zeros((Fdim,), jnp.float32)

    rbf_inputs = jax.random.normal(k3, (N, N, Din), jnp.float32)

    points = jax.random.normal(k4, (N, 3), jnp.float32)
    rij = points[None, :, :] - points[:, None, :]                       # [N, N, 3]
    dij = jnp.linalg.norm(rij, axis=-1, keepdims=True)
    unit_vectors = rij / jnp.maximum(dij, 1e-12)                        # diagonal stays exactly 0

    layer_input = jax.random.normal(k5, (N, Fdim, 1), jnp.float32)      # k must be 1 (cg = eye(5)[...,None])

    out = filter_0_output_2(layer_input, rbf_inputs, unit_vectors, w1, b1, w2, b2)
    out = jax.block_until_ready(out)

    # Pure-JAX reference (mirrors the PyTorch module).
    hidden = jnp.maximum(jnp.tensordot(rbf_inputs, w1, axes=([-1], [1])) + b1, 0.0)
    radial = jnp.tensordot(hidden, w2, axes=([-1], [1])) + b2           # [N, N, F]
    d = jnp.linalg.norm(unit_vectors, axis=-1)
    masked = jnp.where((d < EPSILON)[..., None], 0.0, radial)
    y2 = y_2_ref(unit_vectors)                                          # [N, N, 5]
    f2_out = y2[:, :, None, :] * masked[:, :, :, None]                  # [N, N, F, 5]
    cg = jnp.eye(5, dtype=jnp.float32)[:, :, None]
    ref = jnp.einsum("ijk,abfj,bfk->afi", cg, f2_out,
                     layer_input.reshape(-1, Fdim, 1))                  # [N, F, 5]

    assert out.shape == (N, Fdim, 5), out.shape
    assert jnp.allclose(out, ref, atol=1e-4, rtol=1e-4), float(jnp.max(jnp.abs(out - ref)))
    print("KERNEL_OK")
</pallas_src>

<mosaic_0001>
module attributes {stable_mosaic.version = 11 : i64} {
  func.func @_filter0_out2_kernel(%arg0: i32, %arg1: memref<64x32xf32, #tpu.memory_space<vmem>>, %arg2: memref<64x3xf32, #tpu.memory_space<vmem>>, %arg3: memref<8x4xf32, #tpu.memory_space<vmem>>, %arg4: memref<32x32xf32, #tpu.memory_space<vmem>>, %arg5: memref<1x32xf32, #tpu.memory_space<vmem>>, %arg6: memref<4x32xf32, #tpu.memory_space<vmem>>, %arg7: memref<1x4xf32, #tpu.memory_space<vmem>>, %arg8: memref<8x20xf32, #tpu.memory_space<vmem>>) attributes {dimension_semantics = [#tpu.dimension_semantics<arbitrary>], iteration_bounds = array<i64: 1>, scalar_prefetch = 0 : i64, scratch_operands = 0 : i64, tpu.core_type = #tpu.core_type<tc>, window_params = [{pipeline_mode = #tpu.pipeline_mode<synchronous>, transform_indices = @transform_0, window_bounds = array<i64: 64, 32>}, {pipeline_mode = #tpu.pipeline_mode<synchronous>, transform_indices = @transform_1, window_bounds = array<i64: 64, 3>}, {pipeline_mode = #tpu.pipeline_mode<synchronous>, transform_indices = @transform_2, window_bounds = array<i64: 8, 4>}, {pipeline_mode = #tpu.pipeline_mode<synchronous>, transform_indices = @transform_3, window_bounds = array<i64: 32, 32>}, {pipeline_mode = #tpu.pipeline_mode<synchronous>, transform_indices = @transform_4, window_bounds = array<i64: 1, 32>}, {pipeline_mode = #tpu.pipeline_mode<synchronous>, transform_indices = @transform_5, window_bounds = array<i64: 4, 32>}, {pipeline_mode = #tpu.pipeline_mode<synchronous>, transform_indices = @transform_6, window_bounds = array<i64: 1, 4>}, {pipeline_mode = #tpu.pipeline_mode<synchronous>, transform_indices = @transform_7, window_bounds = array<i64: 8, 20>}]} {
    %c0 = arith.constant 0 : index
    %c0_0 = arith.constant 0 : index
    %0 = vector.load %arg1[%c0, %c0_0] : memref<64x32xf32, #tpu.memory_space<vmem>>, vector<64x32xf32>
    %c0_1 = arith.constant 0 : index
    %c0_2 = arith.constant 0 : index
    %1 = vector.load %arg4[%c0_1, %c0_2] : memref<32x32xf32, #tpu.memory_space<vmem>>, vector<32x32xf32>
    %cst = arith.constant dense<0.000000e+00> : vector<64x32xf32>
    %2 = tpu.matmul %0, %1, %cst {dimension_numbers = #tpu.dot_dimension_numbers<[1], [1], [0], [0], [0, 0, 1, 0], [], []>} : vector<64x32xf32>, vector<32x32xf32>, vector<64x32xf32> -> vector<64x32xf32>
    %c0_3 = arith.constant 0 : index
    %c0_4 = arith.constant 0 : index
    %3 = vector.load %arg5[%c0_3, %c0_4] : memref<1x32xf32, #tpu.memory_space<vmem>>, vector<1x32xf32>
    %4 = vector.broadcast %3 : vector<1x32xf32> to vector<64x32xf32>
    %5 = arith.addf %2, %4 : vector<64x32xf32>
    %cst_5 = arith.constant 0.000000e+00 : f32
    %6 = vector.broadcast %cst_5 : f32 to vector<64x32xf32>
    %7 = arith.maximumf %5, %6 : vector<64x32xf32>
    %c0_6 = arith.constant 0 : index
    %c0_7 = arith.constant 0 : index
    %8 = vector.load %arg6[%c0_6, %c0_7] : memref<4x32xf32, #tpu.memory_space<vmem>>, vector<4x32xf32>
    %cst_8 = arith.constant dense<0.000000e+00> : vector<64x4xf32>
    %9 = tpu.matmul %7, %8, %cst_8 {dimension_numbers = #tpu.dot_dimension_numbers<[1], [1], [0], [0], [0, 0, 1, 0], [], []>} : vector<64x32xf32>, vector<4x32xf32>, vector<64x4xf32> -> vector<64x4xf32>
    %c0_9 = arith.constant 0 : index
    %c0_10 = arith.constant 0 : index
    %10 = vector.load %arg7[%c0_9, %c0_10] : memref<1x4xf32, #tpu.memory_space<vmem>>, vector<1x4xf32>
    %11 = vector.broadcast %10 : vector<1x4xf32> to vector<64x4xf32>
    %12 = arith.addf %9, %11 : vector<64x4xf32>
    %c0_11 = arith.constant 0 : index
    %c0_12 = arith.constant 0 : index
    %13 = vector.load %arg2[%c0_11, %c0_12] : memref<64x3xf32, #tpu.memory_space<vmem>>, vector<64x3xf32>
    %14 = vector.extract_strided_slice %13 {offsets = [0, 0], sizes = [64, 1], strides = [1, 1]} : vector<64x3xf32> to vector<64x1xf32>
    %15 = vector.extract_strided_slice %13 {offsets = [0, 1], sizes = [64, 1], strides = [1, 1]} : vector<64x3xf32> to vector<64x1xf32>
    %16 = vector.extract_strided_slice %13 {offsets = [0, 2], sizes = [64, 1], strides = [1, 1]} : vector<64x3xf32> to vector<64x1xf32>
    %17 = arith.mulf %14, %14 : vector<64x1xf32>
    %18 = arith.mulf %15, %15 : vector<64x1xf32>
    %19 = arith.addf %17, %18 : vector<64x1xf32>
    %20 = arith.mulf %16, %16 : vector<64x1xf32>
    %21 = arith.addf %19, %20 : vector<64x1xf32>
    %22 = math.sqrt %21 : vector<64x1xf32>
    %cst_13 = arith.constant 9.99999993E-9 : f32
    %23 = vector.broadcast %cst_13 : f32 to vector<64x1xf32>
    %24 = arith.cmpf olt, %22, %23 : vector<64x1xf32>
    %cst_14 = arith.constant 0.000000e+00 : f32
    %25 = vector.shape_cast %24 : vector<64x1xi1> to vector<64x1xi1>
    %26 = vector.broadcast %25 : vector<64x1xi1> to vector<64x4xi1>
    %27 = vector.broadcast %cst_14 : f32 to vector<64x4xf32>
    %28 = arith.select %26, %27, %12 : vector<64x4xi1>, vector<64x4xf32>
    %cst_15 = arith.constant 9.99999993E-9 : f32
    %29 = vector.broadcast %cst_15 : f32 to vector<64x1xf32>
    %30 = arith.maximumf %21, %29 : vector<64x1xf32>
    %cst_16 = arith.constant 1.000000e+00 : f32
    %31 = vector.broadcast %cst_16 : f32 to vector<64x1xf32>
    %32 = arith.divf %31, %30 : vector<64x1xf32>
    %33 = arith.mulf %14, %15 : vector<64x1xf32>
    %34 = arith.mulf %33, %32 : vector<64x1xf32>
    %35 = arith.mulf %15, %16 : vector<64x1xf32>
    %36 = arith.mulf %35, %32 : vector<64x1xf32>
    %cst_17 = arith.constant 2.000000e+00 : f32
    %37 = vector.broadcast %cst_17 : f32 to vector<64x1xf32>
    %38 = arith.mulf %37, %16 : vector<64x1xf32>
    %39 = arith.mulf %38, %16 : vector<64x1xf32>
    %40 = arith.mulf %14, %14 : vector<64x1xf32>
    %41 = arith.subf %39, %40 : vector<64x1xf32>
    %42 = arith.mulf %15, %15 : vector<64x1xf32>
    %43 = arith.subf %41, %42 : vector<64x1xf32>
    %cst_18 = arith.constant 0.288675129 : f32
    %44 = vector.broadcast %cst_18 : f32 to vector<64x1xf32>
    %45 = arith.mulf %32, %44 : vector<64x1xf32>
    %46 = arith.mulf %43, %45 : vector<64x1xf32>
    %47 = arith.mulf %16, %14 : vector<64x1xf32>
    %48 = arith.mulf %47, %32 : vector<64x1xf32>
    %49 = arith.mulf %14, %14 : vector<64x1xf32>
    %50 = arith.mulf %15, %15 : vector<64x1xf32>
    %51 = arith.subf %49, %50 : vector<64x1xf32>
    %cst_19 = arith.constant 5.000000e-01 : f32
    %52 = vector.broadcast %cst_19 : f32 to vector<64x1xf32>
    %53 = arith.mulf %52, %32 : vector<64x1xf32>
    %54 = arith.mulf %51, %53 : vector<64x1xf32>
    %55 = tpu.concatenate %34, %36, %46, %48, %54 in 1 : vector<64x1xf32>, vector<64x1xf32>, vector<64x1xf32>, vector<64x1xf32>, vector<64x1xf32> -> vector<64x5xf32>
    %56 = vector.shape_cast %28 : vector<64x4xf32> to vector<8x8x4xf32>
    %c0_20 = arith.constant 0 : index
    %c0_21 = arith.constant 0 : index
    %57 = vector.load %arg3[%c0_20, %c0_21] : memref<8x4xf32, #tpu.memory_space<vmem>>, vector<8x4xf32>
    %58 = vector.shape_cast %57 : vector<8x4xf32> to vector<1x8x4xf32>
    %59 = vector.broadcast %58 : vector<1x8x4xf32> to vector<8x8x4xf32>
    %60 = arith.mulf %56, %59 : vector<8x8x4xf32>
    %61 = vector.shape_cast %55 : vector<64x5xf32> to vector<8x8x5xf32>
    %62 = vector.extract_strided_slice %60 {offsets = [0, 0, 0], sizes = [8, 8, 1], strides = [1, 1, 1]} : vector<8x8x4xf32> to vector<8x8x1xf32>
    %63 = vector.broadcast %62 : vector<8x8x1xf32> to vector<8x8x5xf32>
    %64 = arith.mulf %63, %61 : vector<8x8x5xf32>
    %65 = vector.extract_strided_slice %60 {offsets = [0, 0, 1], sizes = [8, 8, 1], strides = [1, 1, 1]} : vector<8x8x4xf32> to vector<8x8x1xf32>
    %66 = vector.broadcast %65 : vector<8x8x1xf32> to vector<8x8x5xf32>
    %67 = arith.mulf %66, %61 : vector<8x8x5xf32>
    %68 = vector.extract_strided_slice %60 {offsets = [0, 0, 2], sizes = [8, 8, 1], strides = [1, 1, 1]} : vector<8x8x4xf32> to vector<8x8x1xf32>
    %69 = vector.broadcast %68 : vector<8x8x1xf32> to vector<8x8x5xf32>
    %70 = arith.mulf %69, %61 : vector<8x8x5xf32>
    %71 = vector.extract_strided_slice %60 {offsets = [0, 0, 3], sizes = [8, 8, 1], strides = [1, 1, 1]} : vector<8x8x4xf32> to vector<8x8x1xf32>
    %72 = vector.broadcast %71 : vector<8x8x1xf32> to vector<8x8x5xf32>
    %73 = arith.mulf %72, %61 : vector<8x8x5xf32>
    %74 = tpu.concatenate %64, %67, %70, %73 in 2 : vector<8x8x5xf32>, vector<8x8x5xf32>, vector<8x8x5xf32>, vector<8x8x5xf32> -> vector<8x8x20xf32>
    %cst_22 = arith.constant dense<0.000000e+00> : vector<8x20xf32>
    %75 = vector.multi_reduction <add>, %74, %cst_22 [1] : vector<8x8x20xf32> to vector<8x20xf32>
    %c0_23 = arith.constant 0 : index
    %c0_24 = arith.constant 0 : index
    %76 = vector.load %arg8[%c0_23, %c0_24] : memref<8x20xf32, #tpu.memory_space<vmem>>, vector<8x20xf32>
    tpu.vector_store %arg8[%c0_23, %c0_24], %75 {strides = array<i32>} : memref<8x20xf32, #tpu.memory_space<vmem>>, vector<8x20xf32>,
    return
  }
  func.func @transform_0(%arg0: i32) -> (i32, i32) {
    %c0_i32 = arith.constant 0 : i32
    %c0_i32_0 = arith.constant 0 : i32
    %c0_i32_1 = arith.constant 0 : i32
    return %c0_i32, %c0_i32_0 : i32, i32
  }
  func.func @transform_1(%arg0: i32) -> (i32, i32) {
    %c0_i32 = arith.constant 0 : i32
    %c0_i32_0 = arith.constant 0 : i32
    %c0_i32_1 = arith.constant 0 : i32
    return %c0_i32, %c0_i32_0 : i32, i32
  }
  func.func @transform_2(%arg0: i32) -> (i32, i32) {
    %c0_i32 = arith.constant 0 : i32
    %c0_i32_0 = arith.constant 0 : i32
    %c0_i32_1 = arith.constant 0 : i32
    return %c0_i32, %c0_i32_0 : i32, i32
  }
  func.func @transform_3(%arg0: i32) -> (i32, i32) {
    %c0_i32 = arith.constant 0 : i32
    %c0_i32_0 = arith.constant 0 : i32
    %c0_i32_1 = arith.constant 0 : i32
    return %c0_i32, %c0_i32_0 : i32, i32
  }
  func.func @transform_4(%arg0: i32) -> (i32, i32) {
    %c0_i32 = arith.constant 0 : i32
    %c0_i32_0 = arith.constant 0 : i32
    %c0_i32_1 = arith.constant 0 : i32
    return %c0_i32, %c0_i32_0 : i32, i32
  }
  func.func @transform_5(%arg0: i32) -> (i32, i32) {
    %c0_i32 = arith.constant 0 : i32
    %c0_i32_0 = arith.constant 0 : i32
    %c0_i32_1 = arith.constant 0 : i32
    return %c0_i32, %c0_i32_0 : i32, i32
  }
  func.func @transform_6(%arg0: i32) -> (i32, i32) {
    %c0_i32 = arith.constant 0 : i32
    %c0_i32_0 = arith.constant 0 : i32
    %c0_i32_1 = arith.constant 0 : i32
    return %c0_i32, %c0_i32_0 : i32, i32
  }
  func.func @transform_7(%arg0: i32) -> (i32, i32) {
    %c0_i32 = arith.constant 0 : i32
    %c0_i32_0 = arith.constant 0 : i32
    %c0_i32_1 = arith.constant 0 : i32
    return %c0_i32, %c0_i32_0 : i32, i32
  }
}

</mosaic_0001>

<llo_original>
// kernel: tpu_custom_call.1
$region0: #{tpu_custom_call.1}
  #allocation0 [shape = 'u32[]', space=smem, size = 0x4, offset = 0x4, fixed_abs, tag = 'smem constant byte address 0x4 - core index']
  #allocation1 [shape = 'u32[144,128]{1,0:T(1,128)}', space=vmem, size = 0x12000, scoped, tag = 'internal scratch']
  %s0 = inlined_call_operand.vmem [shape: f32[64,32], index: 0, kind: input, shape index: {}]
  %s1 = inlined_call_operand.vmem [shape: f32[64,3], index: 1, kind: input, shape index: {}]
  %s2 = inlined_call_operand.vmem [shape: f32[8,4], index: 2, kind: input, shape index: {}]
  %s3 = inlined_call_operand.vmem [shape: f32[32,32], index: 3, kind: input, shape index: {}]
  %s4 = inlined_call_operand.vmem [shape: f32[1,32], index: 4, kind: input, shape index: {}]
  %s5 = inlined_call_operand.vmem [shape: f32[4,32], index: 5, kind: input, shape index: {}]
  %s6 = inlined_call_operand.vmem [shape: f32[1,4], index: 6, kind: input, shape index: {}]
  %s7 = inlined_call_operand.hbm [shape: f32[8,20], index: 7, kind: output, shape index: {}]
  %s8 = sld [smem:[#allocation0]]
  $region38: #{tpu_custom_call.1} parent=0
    _
  %s10 = ssub.s32 1, %s8
  %s11 = scalar_select 0, %s10, %s8
  $region1: #{tpu_custom_call.1} parent=0
    #allocation2 [shape = 'u8[4096]{0}', space=vmem, size = 0x1000, scoped, tag = 'output window, operand 0, single buffered']
    #allocation3 [shape = 's32[1]{0}', space=sflag, size = 0x4, scoped, tag = 'scoped memory for tpu_custom_call.1']
    %12 = vsyncpa [#allocation3], 0
    // Predicated region
    $region2: #{tpu_custom_call.1} parent=1 // pred_check
      _
    $region3: #{tpu_custom_call.1} parent=1 // pred_check_branch
      %14 = sbr.rel (0) target = $region5
    $region4: #{tpu_custom_call.1} parent=1 // pred_region
      _
    $region5: #{tpu_custom_call.1} parent=1 // pred_fallthru
      _
    // Predicated region
    $region6: #{tpu_custom_call.1} parent=1 // pred_check
      _
    $region7: #{tpu_custom_call.1} parent=1 // pred_check_branch
      %16 = sbr.rel (0) target = $region9
    $region8: #{tpu_custom_call.1} parent=1 // pred_region
      _
    $region9: #{tpu_custom_call.1} parent=1 // pred_fallthru
      _
    // Predicated region
    $region10: #{tpu_custom_call.1} parent=1 // pred_check
      _
    $region11: #{tpu_custom_call.1} parent=1 // pred_check_branch
      %18 = sbr.rel (0) target = $region13
    $region12: #{tpu_custom_call.1} parent=1 // pred_region
      _
    $region13: #{tpu_custom_call.1} parent=1 // pred_fallthru
      _
    // Predicated region
    $region14: #{tpu_custom_call.1} parent=1 // pred_check
      _
    $region15: #{tpu_custom_call.1} parent=1 // pred_check_branch
      %20 = sbr.rel (0) target = $region17
    $region16: #{tpu_custom_call.1} parent=1 // pred_region
      _
    $region17: #{tpu_custom_call.1} parent=1 // pred_fallthru
      _
    // Predicated region
    $region18: #{tpu_custom_call.1} parent=1 // pred_check
      _
    $region19: #{tpu_custom_call.1} parent=1 // pred_check_branch
      %22 = sbr.rel (0) target = $region21
    $region20: #{tpu_custom_call.1} parent=1 // pred_region
      _
    $region21: #{tpu_custom_call.1} parent=1 // pred_fallthru
      _
    // Predicated region
    $region22: #{tpu_custom_call.1} parent=1 // pred_check
      _
    $region23: #{tpu_custom_call.1} parent=1 // pred_check_branch
      %24 = sbr.rel (0) target = $region25
    $region24: #{tpu_custom_call.1} parent=1 // pred_region
      _
    $region25: #{tpu_custom_call.1} parent=1 // pred_fallthru
      _
    // Predicated region
    $region26: #{tpu_custom_call.1} parent=1 // pred_check
      _
    $region27: #{tpu_custom_call.1} parent=1 // pred_check_branch
      %26 = sbr.rel (0) target = $region29
    $region28: #{tpu_custom_call.1} parent=1 // pred_region
      _
    $region29: #{tpu_custom_call.1} parent=1 // pred_fallthru
      _
    %v27 = vld [vmem:[%s0] sm:$0xff]
    %v28 = vld [vmem:[%s0 + $0x8] sm:$0xff]
    %v29 = vld [vmem:[%s0 + $0x10] sm:$0xff]
    %v30 = vld [vmem:[%s0 + $0x18] sm:$0xff]
    %v31 = vld [vmem:[%s0 + $0x20] sm:$0xff]
    %v32 = vld [vmem:[%s0 + $0x28] sm:$0xff]
    %v33 = vld [vmem:[%s0 + $0x30] sm:$0xff]
    %v34 = vld [vmem:[%s0 + $0x38] sm:$0xff]
    %v35 = vld [vmem:[%s3] sm:$0xff]
    %v36 = vld [vmem:[%s3 + $0x8] sm:$0xff]
    %v37 = vld [vmem:[%s3 + $0x10] sm:$0xff]
    %v38 = vld [vmem:[%s3 + $0x18] sm:$0xff]
    %v39 = vld [vmem:[%s4] sm:$0x1]
    %v41 = vlaneseq
    %v42 = vshrl.u32 %v41, 7
    %v43 = vsub.s32 0, %v42
    %v44 = vrot.slane %v39, %v43
    %vm46 = vcmask 261120
    %v48 = vsel %vm46, %v27, 0
    %v51 = vsel %vm46, %v28, 0
    %v54 = vsel %vm46, %v29, 0
    %v57 = vsel %vm46, %v30, 0
    %v60 = vsel %vm46, %v31, 0
    %v63 = vsel %vm46, %v32, 0
    %v66 = vsel %vm46, %v33, 0
    %v69 = vsel %vm46, %v34, 0
    %v72 = vsel %vm46, %v35, 0
    %v75 = vsel %vm46, %v36, 0
    %v78 = vsel %vm46, %v37, 0
    %v81 = vsel %vm46, %v38, 0
    %83 = vmatprep.subr.mxu0 0.0
    %84 = vmatpush1.xpose.msra.mxu0 %v72
    %85 = vmatprep.subr.mxu0 0.0
    %86 = vmatpush1.xpose.msra.mxu0 %v75
    %87 = vmatprep.subr.mxu0 0.0
    %88 = vmatpush1.xpose.msra.mxu0 %v78
    %89 = vmatprep.subr.mxu0 0.0
    %90 = vmatpush1.xpose.msra.mxu0 %v81
    %91 = vmatprep.subr.mxu0 0.0
    %92 = vmatpush1.xpose.msra.mxu0 0.0
    %93 = vmatprep.subr.mxu0 0.0
    %94 = vmatpush1.xpose.msra.mxu0 0.0
    %95 = vmatprep.subr.mxu0 0.0
    %96 = vmatpush1.xpose.msra.mxu0 0.0
    %97 = vmatprep.subr.mxu0 0.0
    %98 = vmatpush1.xpose.msra.mxu0 0.0
    %99 = vmatprep.subr.mxu0 0.0
    %100 = vmatpush1.xpose.msra.mxu0 0.0
    %101 = vmatprep.subr.mxu0 0.0
    %102 = vmatpush1.xpose.msra.mxu0 0.0
    %103 = vmatprep.subr.mxu0 0.0
    %104 = vmatpush1.xpose.msra.mxu0 0.0
    %105 = vmatprep.subr.mxu0 0.0
    %106 = vmatpush1.xpose.msra.mxu0 0.0
    %107 = vmatprep.subr.mxu0 0.0
    %108 = vmatpush1.xpose.msra.mxu0 0.0
    %109 = vmatprep.subr.mxu0 0.0
    %110 = vmatpush1.xpose.msra.mxu0 0.0
    %111 = vmatprep.subr.mxu0 0.0
    %112 = vmatpush1.xpose.msra.mxu0 0.0
    %113 = vmatprep.subr.mxu0 0.0
    %114 = vmatpush1.xpose.msra.mxu0 0.0
    %115 = vmatprep.subr.mxu0 0.0
    %116 = vmatpush1.xpose.msra.mxu0 0.0
    %117 = vmatprep.subr.mxu0 0.0
    %118 = vmatpush1.xpose.msra.mxu0 0.0
    %119 = vmatprep.subr.mxu0 0.0
    %120 = vmatpush1.xpose.msra.mxu0 0.0
    %121 = vmatprep.subr.mxu0 0.0
    %122 = vmatpush1.xpose.msra.mxu0 0.0
    %123 = vmatprep.subr.mxu0 0.0
    %124 = vmatpush1.xpose.msra.mxu0 0.0
    %125 = vmatprep.subr.mxu0 0.0
    %126 = vmatpush1.xpose.msra.mxu0 0.0
    %127 = vmatprep.subr.mxu0 0.0
    %128 = vmatpush1.xpose.msra.mxu0 0.0
    %129 = vmatprep.subr.mxu0 0.0
    %130 = vmatpush1.xpose.msra.mxu0 0.0
    %131 = vmatprep.subr.mxu0 0.0
    %132 = vmatpush1.xpose.msra.mxu0 0.0
    %133 = vmatprep.subr.mxu0 0.0
    %134 = vmatpush1.xpose.msra.mxu0 0.0
    %135 = vmatprep.subr.mxu0 0.0
    %136 = vmatpush1.xpose.msra.mxu0 0.0
    %137 = vmatprep.subr.mxu0 0.0
    %138 = vmatpush1.xpose.msra.mxu0 0.0
    %139 = vmatprep.subr.mxu0 0.0
    %140 = vmatpush1.xpose.msra.mxu0 0.0
    %141 = vmatprep.subr.mxu0 0.0
    %142 = vmatpush1.xpose.msra.mxu0 0.0
    %143 = vmatprep.subr.mxu0 0.0
    %144 = vmatpush1.xpose.msra.mxu0 0.0
    %145 = vmatprep.subr.mxu0 0.0
    %146 = vmatpush1.xpose.msra.mxu0 0.0
    %147 = vmatprep.mubr.f32.mxu0 0.0
    %148 = vmatmul.mubr.f32.gmra.mrb[0].mxu0 %v48
    %v149 = vpop.f32.mrb[0].mxu0
    %v150 = vadd.f32 %v44, %v149
    %v151 = vpop.f32.mrb[0].mxu0
    %152 = vmatprep.mubr.f32.mxu0 0.0
    %153 = vmatmul.mubr.f32.gmra.mrb[0].mxu0 %v51
    %v154 = vpop.f32.mrb[0].mxu0
    %v155 = vadd.f32 %v44, %v154
    %v156 = vpop.f32.mrb[0].mxu0
    %157 = vmatprep.mubr.f32.mxu0 0.0
    %158 = vmatmul.mubr.f32.gmra.mrb[0].mxu0 %v54
    %v159 = vpop.f32.mrb[0].mxu0
    %v160 = vadd.f32 %v44, %v159
    %v161 = vpop.f32.mrb[0].mxu0
    %162 = vmatprep.mubr.f32.mxu0 0.0
    %163 = vmatmul.mubr.f32.gmra.mrb[0].mxu0 %v57
    %v164 = vpop.f32.mrb[0].mxu0
    %v165 = vadd.f32 %v44, %v164
    %v166 = vpop.f32.mrb[0].mxu0
    %167 = vmatprep.mubr.f32.mxu0 0.0
    %168 = vmatmul.mubr.f32.gmra.mrb[0].mxu0 %v60
    %v169 = vpop.f32.mrb[0].mxu0
    %v170 = vadd.f32 %v44, %v169
    %v171 = vpop.f32.mrb[0].mxu0
    %172 = vmatprep.mubr.f32.mxu0 0.0
    %173 = vmatmul.mubr.f32.gmra.mrb[0].mxu0 %v63
    %v174 = vpop.f32.mrb[0].mxu0
    %v175 = vadd.f32 %v44, %v174
    %v176 = vpop.f32.mrb[0].mxu0
    %177 = vmatprep.mubr.f32.mxu0 0.0
    %178 = vmatmul.mubr.f32.gmra.mrb[0].mxu0 %v66
    %v179 = vpop.f32.mrb[0].mxu0
    %v180 = vadd.f32 %v44, %v179
    %v181 = vpop.f32.mrb[0].mxu0
    %182 = vmatprep.mubr.f32.mxu0 0.0
    %183 = vmatmul.mubr.f32.gmra.mrb[0].mxu0 %v69
    %v184 = vpop.f32.mrb[0].mxu0
    %v185 = vadd.f32 %v44, %v184
    %v186 = vpop.f32.mrb[0].mxu0
    %187 = vdwg.mxu0
    %v188 = vmax.f32 %v150, 0.0
    %v189 = vmax.f32 %v155, 0.0
    %v190 = vmax.f32 %v160, 0.0
    %v191 = vmax.f32 %v165, 0.0
    %v192 = vmax.f32 %v170, 0.0
    %v193 = vmax.f32 %v175, 0.0
    %v194 = vmax.f32 %v180, 0.0
    %v195 = vmax.f32 %v185, 0.0
    %v196 = vld [vmem:[%s5] sm:$0xf]
    %v197 = vld [vmem:[%s6] sm:$0x1]
    %v199 = vlaneseq
    %v200 = vshrl.u32 %v199, 7
    %v201 = vsub.s32 0, %v200
    %v202 = vrot.slane %v197, %v201
    %v205 = vsel %vm46, %v188, 0
    %v208 = vsel %vm46, %v189, 0
    %v211 = vsel %vm46, %v190, 0
    %v214 = vsel %vm46, %v191, 0
    %v217 = vsel %vm46, %v192, 0
    %v220 = vsel %vm46, %v193, 0
    %v223 = vsel %vm46, %v194, 0
    %v226 = vsel %vm46, %v195, 0
    %v229 = vsel %vm46, %v196, 0
    %231 = vmatprep.subr.mxu0 0.0
    %232 = vmatpush1.xpose.msra.mxu0 %v229
    %233 = vmatprep.subr.mxu0 0.0
    %234 = vmatpush1.xpose.msra.mxu0 0.0
    %235 = vmatprep.subr.mxu0 0.0
    %236 = vmatpush1.xpose.msra.mxu0 0.0
    %237 = vmatprep.subr.mxu0 0.0
    %238 = vmatpush1.xpose.msra.mxu0 0.0
    %239 = vmatprep.subr.mxu0 0.0
    %240 = vmatpush1.xpose.msra.mxu0 0.0
    %241 = vmatprep.subr.mxu0 0.0
    %242 = vmatpush1.xpose.msra.mxu0 0.0
    %243 = vmatprep.subr.mxu0 0.0
    %244 = vmatpush1.xpose.msra.mxu0 0.0
    %245 = vmatprep.subr.mxu0 0.0
    %246 = vmatpush1.xpose.msra.mxu0 0.0
    %247 = vmatprep.subr.mxu0 0.0
    %248 = vmatpush1.xpose.msra.mxu0 0.0
    %249 = vmatprep.subr.mxu0 0.0
    %250 = vmatpush1.xpose.msra.mxu0 0.0
    %251 = vmatprep.subr.mxu0 0.0
    %252 = vmatpush1.xpose.msra.mxu0 0.0
    %253 = vmatprep.subr.mxu0 0.0
    %254 = vmatpush1.xpose.msra.mxu0 0.0
    %255 = vmatprep.subr.mxu0 0.0
    %256 = vmatpush1.xpose.msra.mxu0 0.0
    %257 = vmatprep.subr.mxu0 0.0
    %258 = vmatpush1.xpose.msra.mxu0 0.0
    %259 = vmatprep.subr.mxu0 0.0
    %260 = vmatpush1.xpose.msra.mxu0 0.0
    %261 = vmatprep.subr.mxu0 0.0
    %262 = vmatpush1.xpose.msra.mxu0 0.0
    %263 = vmatprep.subr.mxu0 0.0
    %264 = vmatpush1.xpose.msra.mxu0 0.0
    %265 = vmatprep.subr.mxu0 0.0
    %266 = vmatpush1.xpose.msra.mxu0 0.0
    %267 = vmatprep.subr.mxu0 0.0
    %268 = vmatpush1.xpose.msra.mxu0 0.0
    %269 = vmatprep.subr.mxu0 0.0
    %270 = vmatpush1.xpose.msra.mxu0 0.0
    %271 = vmatprep.subr.mxu0 0.0
    %272 = vmatpush1.xpose.msra.mxu0 0.0
    %273 = vmatprep.subr.mxu0 0.0
    %274 = vmatpush1.xpose.msra.mxu0 0.0
    %275 = vmatprep.subr.mxu0 0.0
    %276 = vmatpush1.xpose.msra.mxu0 0.0
    %277 = vmatprep.subr.mxu0 0.0
    %278 = vmatpush1.xpose.msra.mxu0 0.0
    %279 = vmatprep.subr.mxu0 0.0
    %280 = vmatpush1.xpose.msra.mxu0 0.0
    %281 = vmatprep.subr.mxu0 0.0
    %282 = vmatpush1.xpose.msra.mxu0 0.0
    %283 = vmatprep.subr.mxu0 0.0
    %284 = vmatpush1.xpose.msra.mxu0 0.0
    %285 = vmatprep.subr.mxu0 0.0
    %286 = vmatpush1.xpose.msra.mxu0 0.0
    %287 = vmatprep.subr.mxu0 0.0
    %288 = vmatpush1.xpose.msra.mxu0 0.0
    %289 = vmatprep.subr.mxu0 0.0
    %290 = vmatpush1.xpose.msra.mxu0 0.0
    %291 = vmatprep.subr.mxu0 0.0
    %292 = vmatpush1.xpose.msra.mxu0 0.0
    %293 = vmatprep.subr.mxu0 0.0
    %294 = vmatpush1.xpose.msra.mxu0 0.0
    %295 = vmatprep.mubr.f32.mxu0 0.0
    %296 = vmatmul.mubr.f32.gmra.mrb[0].mxu0 %v205
    %v297 = vpop.f32.mrb[0].mxu0
    %v298 = vadd.f32 %v202, %v297
    %v299 = vpop.f32.mrb[0].mxu0
    %300 = vmatprep.mubr.f32.mxu0 0.0
    %301 = vmatmul.mubr.f32.gmra.mrb[0].mxu0 %v208
    %v302 = vpop.f32.mrb[0].mxu0
    %v303 = vadd.f32 %v202, %v302
    %v304 = vpop.f32.mrb[0].mxu0
    %305 = vmatprep.mubr.f32.mxu0 0.0
    %306 = vmatmul.mubr.f32.gmra.mrb[0].mxu0 %v211
    %v307 = vpop.f32.mrb[0].mxu0
    %v308 = vadd.f32 %v202, %v307
    %v309 = vpop.f32.mrb[0].mxu0
    %310 = vmatprep.mubr.f32.mxu0 0.0
    %311 = vmatmul.mubr.f32.gmra.mrb[0].mxu0 %v214
    %v312 = vpop.f32.mrb[0].mxu0
    %v313 = vadd.f32 %v202, %v312
    %v314 = vpop.f32.mrb[0].mxu0
    %315 = vmatprep.mubr.f32.mxu0 0.0
    %316 = vmatmul.mubr.f32.gmra.mrb[0].mxu0 %v217
    %v317 = vpop.f32.mrb[0].mxu0
    %v318 = vadd.f32 %v202, %v317
    %v319 = vpop.f32.mrb[0].mxu0
    %320 = vmatprep.mubr.f32.mxu0 0.0
    %321 = vmatmul.mubr.f32.gmra.mrb[0].mxu0 %v220
    %v322 = vpop.f32.mrb[0].mxu0
    %v323 = vadd.f32 %v202, %v322
    %v324 = vpop.f32.mrb[0].mxu0
    %325 = vmatprep.mubr.f32.mxu0 0.0
    %326 = vmatmul.mubr.f32.gmra.mrb[0].mxu0 %v223
    %v327 = vpop.f32.mrb[0].mxu0
    %v328 = vadd.f32 %v202, %v327
    %v329 = vpop.f32.mrb[0].mxu0
    %330 = vmatprep.mubr.f32.mxu0 0.0
    %331 = vmatmul.mubr.f32.gmra.mrb[0].mxu0 %v226
    %v332 = vpop.f32.mrb[0].mxu0
    %v333 = vadd.f32 %v202, %v332
    %v334 = vpop.f32.mrb[0].mxu0
    %335 = vdwg.mxu0
    %v336 = vld [vmem:[%s1] sm:$0xff]
    %v337 = vld [vmem:[%s1 + $0x8] sm:$0xff]
    %v338 = vld [vmem:[%s1 + $0x10] sm:$0xff]
    %v339 = vld [vmem:[%s1 + $0x18] sm:$0xff]
    %v340 = vld [vmem:[%s1 + $0x20] sm:$0xff]
    %v341 = vld [vmem:[%s1 + $0x28] sm:$0xff]
    %v342 = vld [vmem:[%s1 + $0x30] sm:$0xff]
    %v343 = vld [vmem:[%s1 + $0x38] sm:$0xff]
    %v344 = vmul.f32 %v336, %v336
    %v345 = vmul.f32 %v337, %v337
    %v346 = vmul.f32 %v338, %v338
    %v347 = vmul.f32 %v339, %v339
    %v348 = vmul.f32 %v340, %v340
    %v349 = vmul.f32 %v341, %v341
    %v350 = vmul.f32 %v342, %v342
    %v351 = vmul.f32 %v343, %v343
    %360 = vrot.lane.b32.xlu0 %v344, 127
    %v361 = vpop.permute.xlu0 %360
    %362 = vrot.lane.b32.xlu0 %v345, 127
    %v363 = vpop.permute.xlu0 %362
    %364 = vrot.lane.b32.xlu0 %v346, 127
    %v365 = vpop.permute.xlu0 %364
    %366 = vrot.lane.b32.xlu0 %v347, 127
    %v367 = vpop.permute.xlu0 %366
    %368 = vrot.lane.b32.xlu0 %v348, 127
    %v369 = vpop.permute.xlu0 %368
    %370 = vrot.lane.b32.xlu0 %v349, 127
    %v371 = vpop.permute.xlu0 %370
    %372 = vrot.lane.b32.xlu0 %v350, 127
    %v373 = vpop.permute.xlu0 %372
    %374 = vrot.lane.b32.xlu0 %v351, 127
    %v375 = vpop.permute.xlu0 %374
    %v384 = vadd.f32 %v344, %v361
    %v385 = vadd.f32 %v345, %v363
    %v386 = vadd.f32 %v346, %v365
    %v387 = vadd.f32 %v347, %v367
    %v388 = vadd.f32 %v348, %v369
    %v389 = vadd.f32 %v349, %v371
    %v390 = vadd.f32 %v350, %v373
    %v391 = vadd.f32 %v351, %v375
    %392 = vrot.lane.b32.xlu0 %v344, 126
    %v393 = vpop.permute.xlu0 %392
    %394 = vrot.lane.b32.xlu0 %v345, 126
    %v395 = vpop.permute.xlu0 %394
    %396 = vrot.lane.b32.xlu0 %v346, 126
    %v397 = vpop.permute.xlu0 %396
    %398 = vrot.lane.b32.xlu0 %v347, 126
    %v399 = vpop.permute.xlu0 %398
    %400 = vrot.lane.b32.xlu0 %v348, 126
    %v401 = vpop.permute.xlu0 %400
    %402 = vrot.lane.b32.xlu0 %v349, 126
    %v403 = vpop.permute.xlu0 %402
    %404 = vrot.lane.b32.xlu0 %v350, 126
    %v405 = vpop.permute.xlu0 %404
    %406 = vrot.lane.b32.xlu0 %v351, 126
    %v407 = vpop.permute.xlu0 %406
    %v416 = vadd.f32 %v384, %v393
    %v417 = vadd.f32 %v385, %v395
    %v418 = vadd.f32 %v386, %v397
    %v419 = vadd.f32 %v387, %v399
    %v420 = vadd.f32 %v388, %v401
    %v421 = vadd.f32 %v389, %v403
    %v422 = vadd.f32 %v390, %v405
    %v423 = vadd.f32 %v391, %v407
    %v424 = vrsqrt.pop %v416
    %v425 = vmul.f32 %v416, %v424
    %vm426 = vcmp.eq.f32.partialorder %v416, inf
    %v427 = vsel %vm426, %v416, %v425
    %vm428 = vcmp.eq.f32.partialorder %v416, 0.0
    %v429 = vand.u32 %v416, 2147483648
    %v430 = vsel %vm428, %v429, %v427
    %v431 = vrsqrt.pop %v417
    %v432 = vmul.f32 %v417, %v431
    %vm433 = vcmp.eq.f32.partialorder %v417, inf
    %v434 = vsel %vm433, %v417, %v432
    %vm435 = vcmp.eq.f32.partialorder %v417, 0.0
    %v436 = vand.u32 %v417, 2147483648
    %v437 = vsel %vm435, %v436, %v434
    %v438 = vrsqrt.pop %v418
    %v439 = vmul.f32 %v418, %v438
    %vm440 = vcmp.eq.f32.partialorder %v418, inf
    %v441 = vsel %vm440, %v418, %v439
    %vm442 = vcmp.eq.f32.partialorder %v418, 0.0
    %v443 = vand.u32 %v418, 2147483648
    %v444 = vsel %vm442, %v443, %v441
    %v445 = vrsqrt.pop %v419
    %v446 = vmul.f32 %v419, %v445
    %vm447 = vcmp.eq.f32.partialorder %v419, inf
    %v448 = vsel %vm447, %v419, %v446
    %vm449 = vcmp.eq.f32.partialorder %v419, 0.0
    %v450 = vand.u32 %v419, 2147483648
    %v451 = vsel %vm449, %v450, %v448
    %v452 = vrsqrt.pop %v420
    %v453 = vmul.f32 %v420, %v452
    %vm454 = vcmp.eq.f32.partialorder %v420, inf
    %v455 = vsel %vm454, %v420, %v453
    %vm456 = vcmp.eq.f32.partialorder %v420, 0.0
    %v457 = vand.u32 %v420, 2147483648
    %v458 = vsel %vm456, %v457, %v455
    %v459 = vrsqrt.pop %v421
    %v460 = vmul.f32 %v421, %v459
    %vm461 = vcmp.eq.f32.partialorder %v421, inf
    %v462 = vsel %vm461, %v421, %v460
    %vm463 = vcmp.eq.f32.partialorder %v421, 0.0
    %v464 = vand.u32 %v421, 2147483648
    %v465 = vsel %vm463, %v464, %v462
    %v466 = vrsqrt.pop %v422
    %v467 = vmul.f32 %v422, %v466
    %vm468 = vcmp.eq.f32.partialorder %v422, inf
    %v469 = vsel %vm468, %v422, %v467
    %vm470 = vcmp.eq.f32.partialorder %v422, 0.0
    %v471 = vand.u32 %v422, 2147483648
    %v472 = vsel %vm470, %v471, %v469
    %v473 = vrsqrt.pop %v423
    %v474 = vmul.f32 %v423, %v473
    %vm475 = vcmp.eq.f32.partialorder %v423, inf
    %v476 = vsel %vm475, %v423, %v474
    %vm477 = vcmp.eq.f32.partialorder %v423, 0.0
    %v478 = vand.u32 %v423, 2147483648
    %v479 = vsel %vm477, %v478, %v476
    %vm480 = vcmp.lt.f32.partialorder %v430, 1e-08
    %vm481 = vcmp.lt.f32.partialorder %v437, 1e-08
    %vm482 = vcmp.lt.f32.partialorder %v444, 1e-08
    %vm483 = vcmp.lt.f32.partialorder %v451, 1e-08
    %vm484 = vcmp.lt.f32.partialorder %v458, 1e-08
    %vm485 = vcmp.lt.f32.partialorder %v465, 1e-08
    %vm486 = vcmp.lt.f32.partialorder %v472, 1e-08
    %vm487 = vcmp.lt.f32.partialorder %v479, 1e-08
    %v488 = vsel %vm480, 1, 0
    %v489 = vsel %vm481, 1, 0
    %v490 = vsel %vm482, 1, 0
    %v491 = vsel %vm483, 1, 0
    %v492 = vsel %vm484, 1, 0
    %v493 = vsel %vm485, 1, 0
    %v494 = vsel %vm486, 1, 0
    %v495 = vsel %vm487, 1, 0
    %496 = vset.pattern.permute.xlu0 0
    %497 = vperm.xlu0 %496, %v488
    %v498 = vpop.permute.xlu0 %497
    %499 = vset.pattern.permute.xlu0 0
    %500 = vperm.xlu0 %499, %v489
    %v501 = vpop.permute.xlu0 %500
    %502 = vset.pattern.permute.xlu0 0
    %503 = vperm.xlu0 %502, %v490
    %v504 = vpop.permute.xlu0 %503
    %505 = vset.pattern.permute.xlu0 0
    %506 = vperm.xlu0 %505, %v491
    %v507 = vpop.permute.xlu0 %506
    %508 = vset.pattern.permute.xlu0 0
    %509 = vperm.xlu0 %508, %v492
    %v510 = vpop.permute.xlu0 %509
    %511 = vset.pattern.permute.xlu0 0
    %512 = vperm.xlu0 %511, %v493
    %v513 = vpop.permute.xlu0 %512
    %514 = vset.pattern.permute.xlu0 0
    %515 = vperm.xlu0 %514, %v494
    %v516 = vpop.permute.xlu0 %515
    %517 = vset.pattern.permute.xlu0 0
    %518 = vperm.xlu0 %517, %v495
    %v519 = vpop.permute.xlu0 %518
    %vm520 = vcmp.eq.s32.totalorder %v498, 1
    %vm521 = vcmp.eq.s32.totalorder %v501, 1
    %vm522 = vcmp.eq.s32.totalorder %v504, 1
    %vm523 = vcmp.eq.s32.totalorder %v507, 1
    %vm524 = vcmp.eq.s32.totalorder %v510, 1
    %vm525 = vcmp.eq.s32.totalorder %v513, 1
    %vm526 = vcmp.eq.s32.totalorder %v516, 1
    %vm527 = vcmp.eq.s32.totalorder %v519, 1
    %v528 = vsel %vm520, 0.0, %v298
    %v529 = vsel %vm521, 0.0, %v303
    %v530 = vsel %vm522, 0.0, %v308
    %v531 = vsel %vm523, 0.0, %v313
    %v532 = vsel %vm524, 0.0, %v318
    %v533 = vsel %vm525, 0.0, %v323
    %v534 = vsel %vm526, 0.0, %v328
    %v535 = vsel %vm527, 0.0, %v333
    %v536 = vmax.f32 %v416, 1e-08
    %v537 = vmax.f32 %v417, 1e-08
    %v538 = vmax.f32 %v418, 1e-08
    %v539 = vmax.f32 %v419, 1e-08
    %v540 = vmax.f32 %v420, 1e-08
    %v541 = vmax.f32 %v421, 1e-08
    %v542 = vmax.f32 %v422, 1e-08
    %v543 = vmax.f32 %v423, 1e-08
    %v544 = vrcp.pop %v536
    %v545 = vmul.f32 1.0, %v544
    %v546 = vrcp.pop %v537
    %v547 = vmul.f32 1.0, %v546
    %v548 = vrcp.pop %v538
    %v549 = vmul.f32 1.0, %v548
    %v550 = vrcp.pop %v539
    %v551 = vmul.f32 1.0, %v550
    %v552 = vrcp.pop %v540
    %v553 = vmul.f32 1.0, %v552
    %v554 = vrcp.pop %v541
    %v555 = vmul.f32 1.0, %v554
    %v556 = vrcp.pop %v542
    %v557 = vmul.f32 1.0, %v556
    %v558 = vrcp.pop %v543
    %v559 = vmul.f32 1.0, %v558
    %568 = vrot.lane.b32.xlu0 %v336, 127
    %v569 = vpop.permute.xlu0 %568
    %570 = vrot.lane.b32.xlu0 %v337, 127
    %v571 = vpop.permute.xlu0 %570
    %572 = vrot.lane.b32.xlu0 %v338, 127
    %v573 = vpop.permute.xlu0 %572
    %574 = vrot.lane.b32.xlu0 %v339, 127
    %v575 = vpop.permute.xlu0 %574
    %576 = vrot.lane.b32.xlu0 %v340, 127
    %v577 = vpop.permute.xlu0 %576
    %578 = vrot.lane.b32.xlu0 %v341, 127
    %v579 = vpop.permute.xlu0 %578
    %580 = vrot.lane.b32.xlu0 %v342, 127
    %v581 = vpop.permute.xlu0 %580
    %582 = vrot.lane.b32.xlu0 %v343, 127
    %v583 = vpop.permute.xlu0 %582
    %v592 = vmul.f32 %v336, %v569
    %v593 = vmul.f32 %v337, %v571
    %v594 = vmul.f32 %v338, %v573
    %v595 = vmul.f32 %v339, %v575
    %v596 = vmul.f32 %v340, %v577
    %v597 = vmul.f32 %v341, %v579
    %v598 = vmul.f32 %v342, %v581
    %v599 = vmul.f32 %v343, %v583
    %v600 = vmul.f32 %v592, %v545
    %v601 = vmul.f32 %v593, %v547
    %v602 = vmul.f32 %v594, %v549
    %v603 = vmul.f32 %v595, %v551
    %v604 = vmul.f32 %v596, %v553
    %v605 = vmul.f32 %v597, %v555
    %v606 = vmul.f32 %v598, %v557
    %v607 = vmul.f32 %v599, %v559
    %616 = vrot.lane.b32.xlu0 %v545, 1
    %v617 = vpop.permute.xlu0 %616
    %618 = vrot.lane.b32.xlu0 %v547, 1
    %v619 = vpop.permute.xlu0 %618
    %620 = vrot.lane.b32.xlu0 %v549, 1
    %v621 = vpop.permute.xlu0 %620
    %622 = vrot.lane.b32.xlu0 %v551, 1
    %v623 = vpop.permute.xlu0 %622
    %624 = vrot.lane.b32.xlu0 %v553, 1
    %v625 = vpop.permute.xlu0 %624
    %626 = vrot.lane.b32.xlu0 %v555, 1
    %v627 = vpop.permute.xlu0 %626
    %628 = vrot.lane.b32.xlu0 %v557, 1
    %v629 = vpop.permute.xlu0 %628
    %630 = vrot.lane.b32.xlu0 %v559, 1
    %v631 = vpop.permute.xlu0 %630
    %v640 = vmul.f32 %v592, %v617
    %v641 = vmul.f32 %v593, %v619
    %v642 = vmul.f32 %v594, %v621
    %v643 = vmul.f32 %v595, %v623
    %v644 = vmul.f32 %v596, %v625
    %v645 = vmul.f32 %v597, %v627
    %v646 = vmul.f32 %v598, %v629
    %v647 = vmul.f32 %v599, %v631
    %v648 = vmul.f32 %v336, 2.0
    %v649 = vmul.f32 %v337, 2.0
    %v650 = vmul.f32 %v338, 2.0
    %v651 = vmul.f32 %v339, 2.0
    %v652 = vmul.f32 %v340, 2.0
    %v653 = vmul.f32 %v341, 2.0
    %v654 = vmul.f32 %v342, 2.0
    %v655 = vmul.f32 %v343, 2.0
    %v656 = vmul.f32 %v648, %v336
    %v657 = vmul.f32 %v649, %v337
    %v658 = vmul.f32 %v650, %v338
    %v659 = vmul.f32 %v651, %v339
    %v660 = vmul.f32 %v652, %v340
    %v661 = vmul.f32 %v653, %v341
    %v662 = vmul.f32 %v654, %v342
    %v663 = vmul.f32 %v655, %v343
    %664 = vrot.lane.b32.xlu0 %v344, 2
    %v665 = vpop.permute.xlu0 %664
    %666 = vrot.lane.b32.xlu0 %v345, 2
    %v667 = vpop.permute.xlu0 %666
    %668 = vrot.lane.b32.xlu0 %v346, 2
    %v669 = vpop.permute.xlu0 %668
    %670 = vrot.lane.b32.xlu0 %v347, 2
    %v671 = vpop.permute.xlu0 %670
    %672 = vrot.lane.b32.xlu0 %v348, 2
    %v673 = vpop.permute.xlu0 %672
    %674 = vrot.lane.b32.xlu0 %v349, 2
    %v675 = vpop.permute.xlu0 %674
    %676 = vrot.lane.b32.xlu0 %v350, 2
    %v677 = vpop.permute.xlu0 %676
    %678 = vrot.lane.b32.xlu0 %v351, 2
    %v679 = vpop.permute.xlu0 %678
    %v688 = vsub.f32 %v656, %v665
    %v689 = vsub.f32 %v657, %v667
    %v690 = vsub.f32 %v658, %v669
    %v691 = vsub.f32 %v659, %v671
    %v692 = vsub.f32 %v660, %v673
    %v693 = vsub.f32 %v661, %v675
    %v694 = vsub.f32 %v662, %v677
    %v695 = vsub.f32 %v663, %v679
    %696 = vrot.lane.b32.xlu0 %v344, 1
    %v697 = vpop.permute.xlu0 %696
    %698 = vrot.lane.b32.xlu0 %v345, 1
    %v699 = vpop.permute.xlu0 %698
    %700 = vrot.lane.b32.xlu0 %v346, 1
    %v701 = vpop.permute.xlu0 %700
    %702 = vrot.lane.b32.xlu0 %v347, 1
    %v703 = vpop.permute.xlu0 %702
    %704 = vrot.lane.b32.xlu0 %v348, 1
    %v705 = vpop.permute.xlu0 %704
    %706 = vrot.lane.b32.xlu0 %v349, 1
    %v707 = vpop.permute.xlu0 %706
    %708 = vrot.lane.b32.xlu0 %v350, 1
    %v709 = vpop.permute.xlu0 %708
    %710 = vrot.lane.b32.xlu0 %v351, 1
    %v711 = vpop.permute.xlu0 %710
    %v720 = vsub.f32 %v688, %v697
    %v721 = vsub.f32 %v689, %v699
    %v722 = vsub.f32 %v690, %v701
    %v723 = vsub.f32 %v691, %v703
    %v724 = vsub.f32 %v692, %v705
    %v725 = vsub.f32 %v693, %v707
    %v726 = vsub.f32 %v694, %v709
    %v727 = vsub.f32 %v695, %v711
    %v728 = vmul.f32 %v545, 0.28867513
    %v729 = vmul.f32 %v547, 0.28867513
    %v730 = vmul.f32 %v549, 0.28867513
    %v731 = vmul.f32 %v551, 0.28867513
    %v732 = vmul.f32 %v553, 0.28867513
    %v733 = vmul.f32 %v555, 0.28867513
    %v734 = vmul.f32 %v557, 0.28867513
    %v735 = vmul.f32 %v559, 0.28867513
    %744 = vrot.lane.b32.xlu0 %v728, 2
    %v745 = vpop.permute.xlu0 %744
    %746 = vrot.lane.b32.xlu0 %v729, 2
    %v747 = vpop.permute.xlu0 %746
    %748 = vrot.lane.b32.xlu0 %v730, 2
    %v749 = vpop.permute.xlu0 %748
    %750 = vrot.lane.b32.xlu0 %v731, 2
    %v751 = vpop.permute.xlu0 %750
    %752 = vrot.lane.b32.xlu0 %v732, 2
    %v753 = vpop.permute.xlu0 %752
    %754 = vrot.lane.b32.xlu0 %v733, 2
    %v755 = vpop.permute.xlu0 %754
    %756 = vrot.lane.b32.xlu0 %v734, 2
    %v757 = vpop.permute.xlu0 %756
    %758 = vrot.lane.b32.xlu0 %v735, 2
    %v759 = vpop.permute.xlu0 %758
    %v768 = vmul.f32 %v720, %v745
    %v769 = vmul.f32 %v721, %v747
    %v770 = vmul.f32 %v722, %v749
    %v771 = vmul.f32 %v723, %v751
    %v772 = vmul.f32 %v724, %v753
    %v773 = vmul.f32 %v725, %v755
    %v774 = vmul.f32 %v726, %v757
    %v775 = vmul.f32 %v727, %v759
    %776 = vrot.lane.b32.xlu0 %v336, 2
    %v777 = vpop.permute.xlu0 %776
    %778 = vrot.lane.b32.xlu0 %v337, 2
    %v779 = vpop.permute.xlu0 %778
    %780 = vrot.lane.b32.xlu0 %v338, 2
    %v781 = vpop.permute.xlu0 %780
    %782 = vrot.lane.b32.xlu0 %v339, 2
    %v783 = vpop.permute.xlu0 %782
    %784 = vrot.lane.b32.xlu0 %v340, 2
    %v785 = vpop.permute.xlu0 %784
    %786 = vrot.lane.b32.xlu0 %v341, 2
    %v787 = vpop.permute.xlu0 %786
    %788 = vrot.lane.b32.xlu0 %v342, 2
    %v789 = vpop.permute.xlu0 %788
    %790 = vrot.lane.b32.xlu0 %v343, 2
    %v791 = vpop.permute.xlu0 %790
    %v800 = vmul.f32 %v336, %v777
    %v801 = vmul.f32 %v337, %v779
    %v802 = vmul.f32 %v338, %v781
    %v803 = vmul.f32 %v339, %v783
    %v804 = vmul.f32 %v340, %v785
    %v805 = vmul.f32 %v341, %v787
    %v806 = vmul.f32 %v342, %v789
    %v807 = vmul.f32 %v343, %v791
    %808 = vrot.lane.b32.xlu0 %v545, 2
    %v809 = vpop.permute.xlu0 %808
    %810 = vrot.lane.b32.xlu0 %v547, 2
    %v811 = vpop.permute.xlu0 %810
    %812 = vrot.lane.b32.xlu0 %v549, 2
    %v813 = vpop.permute.xlu0 %812
    %814 = vrot.lane.b32.xlu0 %v551, 2
    %v815 = vpop.permute.xlu0 %814
    %816 = vrot.lane.b32.xlu0 %v553, 2
    %v817 = vpop.permute.xlu0 %816
    %818 = vrot.lane.b32.xlu0 %v555, 2
    %v819 = vpop.permute.xlu0 %818
    %820 = vrot.lane.b32.xlu0 %v557, 2
    %v821 = vpop.permute.xlu0 %820
    %822 = vrot.lane.b32.xlu0 %v559, 2
    %v823 = vpop.permute.xlu0 %822
    %v832 = vmul.f32 %v800, %v809
    %v833 = vmul.f32 %v801, %v811
    %v834 = vmul.f32 %v802, %v813
    %v835 = vmul.f32 %v803, %v815
    %v836 = vmul.f32 %v804, %v817
    %v837 = vmul.f32 %v805, %v819
    %v838 = vmul.f32 %v806, %v821
    %v839 = vmul.f32 %v807, %v823
    %v840 = vsub.f32 %v344, %v361
    %v841 = vsub.f32 %v345, %v363
    %v842 = vsub.f32 %v346, %v365
    %v843 = vsub.f32 %v347, %v367
    %v844 = vsub.f32 %v348, %v369
    %v845 = vsub.f32 %v349, %v371
    %v846 = vsub.f32 %v350, %v373
    %v847 = vsub.f32 %v351, %v375
    %v848 = vmul.f32 %v545, 0.5
    %v849 = vmul.f32 %v547, 0.5
    %v850 = vmul.f32 %v549, 0.5
    %v851 = vmul.f32 %v551, 0.5
    %v852 = vmul.f32 %v553, 0.5
    %v853 = vmul.f32 %v555, 0.5
    %v854 = vmul.f32 %v557, 0.5
    %v855 = vmul.f32 %v559, 0.5
    %v856 = vmul.f32 %v840, %v848
    %v857 = vmul.f32 %v841, %v849
    %v858 = vmul.f32 %v842, %v850
    %v859 = vmul.f32 %v843, %v851
    %v860 = vmul.f32 %v844, %v852
    %v861 = vmul.f32 %v845, %v853
    %v862 = vmul.f32 %v846, %v854
    %v863 = vmul.f32 %v847, %v855
    %872 = vrot.lane.b32.xlu0 %v832, 1
    %v873 = vpop.permute.xlu0 %872
    %874 = vrot.lane.b32.xlu0 %v833, 1
    %v875 = vpop.permute.xlu0 %874
    %876 = vrot.lane.b32.xlu0 %v834, 1
    %v877 = vpop.permute.xlu0 %876
    %878 = vrot.lane.b32.xlu0 %v835, 1
    %v879 = vpop.permute.xlu0 %878
    %880 = vrot.lane.b32.xlu0 %v836, 1
    %v881 = vpop.permute.xlu0 %880
    %882 = vrot.lane.b32.xlu0 %v837, 1
    %v883 = vpop.permute.xlu0 %882
    %884 = vrot.lane.b32.xlu0 %v838, 1
    %v885 = vpop.permute.xlu0 %884
    %886 = vrot.lane.b32.xlu0 %v839, 1
    %v887 = vpop.permute.xlu0 %886
    %904 = vrot.lane.b32.xlu0 %v856, 4
    %v905 = vpop.permute.xlu0 %904
    %906 = vrot.lane.b32.xlu0 %v857, 4
    %v907 = vpop.permute.xlu0 %906
    %908 = vrot.lane.b32.xlu0 %v858, 4
    %v909 = vpop.permute.xlu0 %908
    %910 = vrot.lane.b32.xlu0 %v859, 4
    %v911 = vpop.permute.xlu0 %910
    %912 = vrot.lane.b32.xlu0 %v860, 4
    %v913 = vpop.permute.xlu0 %912
    %914 = vrot.lane.b32.xlu0 %v861, 4
    %v915 = vpop.permute.xlu0 %914
    %916 = vrot.lane.b32.xlu0 %v862, 4
    %v917 = vpop.permute.xlu0 %916
    %918 = vrot.lane.b32.xlu0 %v863, 4
    %v919 = vpop.permute.xlu0 %918
    %vm928 = vcmask 7168
    %v929 = vsel %vm928, %v600, %v640
    %v930 = vsel %vm928, %v601, %v641
    %v931 = vsel %vm928, %v602, %v642
    %v932 = vsel %vm928, %v603, %v643
    %v933 = vsel %vm928, %v604, %v644
    %v934 = vsel %vm928, %v605, %v645
    %v935 = vsel %vm928, %v606, %v646
    %v936 = vsel %vm928, %v607, %v647
    %vm937 = vcmask 15360
    %v938 = vsel %vm937, %v929, %v768
    %v939 = vsel %vm937, %v930, %v769
    %v940 = vsel %vm937, %v931, %v770
    %v941 = vsel %vm937, %v932, %v771
    %v942 = vsel %vm937, %v933, %v772
    %v943 = vsel %vm937, %v934, %v773
    %v944 = vsel %vm937, %v935, %v774
    %v945 = vsel %vm937, %v936, %v775
    %vm946 = vcmask 23552
    %v947 = vsel %vm946, %v938, %v873
    %v948 = vsel %vm946, %v939, %v875
    %v949 = vsel %vm946, %v940, %v877
    %v950 = vsel %vm946, %v941, %v879
    %v951 = vsel %vm946, %v942, %v881
    %v952 = vsel %vm946, %v943, %v883
    %v953 = vsel %vm946, %v944, %v885
    %v954 = vsel %vm946, %v945, %v887
    %vm955 = vcmask 31744
    %v956 = vsel %vm955, %v947, %v905
    %v957 = vsel %vm955, %v948, %v907
    %v958 = vsel %vm955, %v949, %v909
    %v959 = vsel %vm955, %v950, %v911
    %v960 = vsel %vm955, %v951, %v913
    %v961 = vsel %vm955, %v952, %v915
    %v962 = vsel %vm955, %v953, %v917
    %v963 = vsel %vm955, %v954, %v919
    %v964 = vld [vmem:[%s2] sm:$0xff]
    %v965 = vmul.f32 %v528, %v964
    %v966 = vmul.f32 %v529, %v964
    %v967 = vmul.f32 %v530, %v964
    %v968 = vmul.f32 %v531, %v964
    %v969 = vmul.f32 %v532, %v964
    %v970 = vmul.f32 %v533, %v964
    %v971 = vmul.f32 %v534, %v964
    %v972 = vmul.f32 %v535, %v964
    %974 = vset.pattern.permute.xlu0 0
    %975 = vperm.xlu0 %974, %v965
    %v976 = vpop.permute.xlu0 %975
    %979 = vset.pattern.permute.xlu0 0
    %980 = vperm.xlu0 %979, %v966
    %v981 = vpop.permute.xlu0 %980
    %984 = vset.pattern.permute.xlu0 0
    %985 = vperm.xlu0 %984, %v967
    %v986 = vpop.permute.xlu0 %985
    %989 = vset.pattern.permute.xlu0 0
    %990 = vperm.xlu0 %989, %v968
    %v991 = vpop.permute.xlu0 %990
    %994 = vset.pattern.permute.xlu0 0
    %995 = vperm.xlu0 %994, %v969
    %v996 = vpop.permute.xlu0 %995
    %999 = vset.pattern.permute.xlu0 0
    %1000 = vperm.xlu0 %999, %v970
    %v1001 = vpop.permute.xlu0 %1000
    %1004 = vset.pattern.permute.xlu0 0
    %1005 = vperm.xlu0 %1004, %v971
    %v1006 = vpop.permute.xlu0 %1005
    %1009 = vset.pattern.permute.xlu0 0
    %1010 = vperm.xlu0 %1009, %v972
    %v1011 = vpop.permute.xlu0 %1010
    %v1013 = vmul.f32 %v976, %v956
    %v1014 = vmul.f32 %v981, %v957
    %v1015 = vmul.f32 %v986, %v958
    %v1016 = vmul.f32 %v991, %v959
    %v1017 = vmul.f32 %v996, %v960
    %v1018 = vmul.f32 %v1001, %v961
    %v1019 = vmul.f32 %v1006, %v962
    %v1020 = vmul.f32 %v1011, %v963
    %1021 = vset.pattern.permute.xlu0 1
    %1022 = vperm.xlu0 %1021, %v965
    %v1023 = vpop.permute.xlu0 %1022
    %1025 = vset.pattern.permute.xlu0 1
    %1026 = vperm.xlu0 %1025, %v966
    %v1027 = vpop.permute.xlu0 %1026
    %1029 = vset.pattern.permute.xlu0 1
    %1030 = vperm.xlu0 %1029, %v967
    %v1031 = vpop.permute.xlu0 %1030
    %1033 = vset.pattern.permute.xlu0 1
    %1034 = vperm.xlu0 %1033, %v968
    %v1035 = vpop.permute.xlu0 %1034
    %1037 = vset.pattern.permute.xlu0 1
    %1038 = vperm.xlu0 %1037, %v969
    %v1039 = vpop.permute.xlu0 %1038
    %1041 = vset.pattern.permute.xlu0 1
    %1042 = vperm.xlu0 %1041, %v970
    %v1043 = vpop.permute.xlu0 %1042
    %1045 = vset.pattern.permute.xlu0 1
    %1046 = vperm.xlu0 %1045, %v971
    %v1047 = vpop.permute.xlu0 %1046
    %1049 = vset.pattern.permute.xlu0 1
    %1050 = vperm.xlu0 %1049, %v972
    %v1051 = vpop.permute.xlu0 %1050
    %v1053 = vmul.f32 %v1023, %v956
    %v1054 = vmul.f32 %v1027, %v957
    %v1055 = vmul.f32 %v1031, %v958
    %v1056 = vmul.f32 %v1035, %v959
    %v1057 = vmul.f32 %v1039, %v960
    %v1058 = vmul.f32 %v1043, %v961
    %v1059 = vmul.f32 %v1047, %v962
    %v1060 = vmul.f32 %v1051, %v963
    %1061 = vset.pattern.permute.xlu0 2
    %1062 = vperm.xlu0 %1061, %v965
    %v1063 = vpop.permute.xlu0 %1062
    %1065 = vset.pattern.permute.xlu0 2
    %1066 = vperm.xlu0 %1065, %v966
    %v1067 = vpop.permute.xlu0 %1066
    %1069 = vset.pattern.permute.xlu0 2
    %1070 = vperm.xlu0 %1069, %v967
    %v1071 = vpop.permute.xlu0 %1070
    %1073 = vset.pattern.permute.xlu0 2
    %1074 = vperm.xlu0 %1073, %v968
    %v1075 = vpop.permute.xlu0 %1074
    %1077 = vset.pattern.permute.xlu0 2
    %1078 = vperm.xlu0 %1077, %v969
    %v1079 = vpop.permute.xlu0 %1078
    %1081 = vset.pattern.permute.xlu0 2
    %1082 = vperm.xlu0 %1081, %v970
    %v1083 = vpop.permute.xlu0 %1082
    %1085 = vset.pattern.permute.xlu0 2
    %1086 = vperm.xlu0 %1085, %v971
    %v1087 = vpop.permute.xlu0 %1086
    %1089 = vset.pattern.permute.xlu0 2
    %1090 = vperm.xlu0 %1089, %v972
    %v1091 = vpop.permute.xlu0 %1090
    %v1093 = vmul.f32 %v1063, %v956
    %v1094 = vmul.f32 %v1067, %v957
    %v1095 = vmul.f32 %v1071, %v958
    %v1096 = vmul.f32 %v1075, %v959
    %v1097 = vmul.f32 %v1079, %v960
    %v1098 = vmul.f32 %v1083, %v961
    %v1099 = vmul.f32 %v1087, %v962
    %v1100 = vmul.f32 %v1091, %v963
    %1101 = vset.pattern.permute.xlu0 3
    %1102 = vperm.xlu0 %1101, %v965
    %v1103 = vpop.permute.xlu0 %1102
    %1105 = vset.pattern.permute.xlu0 3
    %1106 = vperm.xlu0 %1105, %v966
    %v1107 = vpop.permute.xlu0 %1106
    %1109 = vset.pattern.permute.xlu0 3
    %1110 = vperm.xlu0 %1109, %v967
    %v1111 = vpop.permute.xlu0 %1110
    %1113 = vset.pattern.permute.xlu0 3
    %1114 = vperm.xlu0 %1113, %v968
    %v1115 = vpop.permute.xlu0 %1114
    %1117 = vset.pattern.permute.xlu0 3
    %1118 = vperm.xlu0 %1117, %v969
    %v1119 = vpop.permute.xlu0 %1118
    %1121 = vset.pattern.permute.xlu0 3
    %1122 = vperm.xlu0 %1121, %v970
    %v1123 = vpop.permute.xlu0 %1122
    %1125 = vset.pattern.permute.xlu0 3
    %1126 = vperm.xlu0 %1125, %v971
    %v1127 = vpop.permute.xlu0 %1126
    %1129 = vset.pattern.permute.xlu0 3
    %1130 = vperm.xlu0 %1129, %v972
    %v1131 = vpop.permute.xlu0 %1130
    %v1133 = vmul.f32 %v1103, %v956
    %v1134 = vmul.f32 %v1107, %v957
    %v1135 = vmul.f32 %v1111, %v958
    %v1136 = vmul.f32 %v1115, %v959
    %v1137 = vmul.f32 %v1119, %v960
    %v1138 = vmul.f32 %v1123, %v961
    %v1139 = vmul.f32 %v1127, %v962
    %v1140 = vmul.f32 %v1131, %v963
    %1149 = vrot.lane.b32.xlu0 %v1053, 5
    %v1150 = vpop.permute.xlu0 %1149
    %1151 = vrot.lane.b32.xlu0 %v1054, 5
    %v1152 = vpop.permute.xlu0 %1151
    %1153 = vrot.lane.b32.xlu0 %v1055, 5
    %v1154 = vpop.permute.xlu0 %1153
    %1155 = vrot.lane.b32.xlu0 %v1056, 5
    %v1156 = vpop.permute.xlu0 %1155
    %1157 = vrot.lane.b32.xlu0 %v1057, 5
    %v1158 = vpop.permute.xlu0 %1157
    %1159 = vrot.lane.b32.xlu0 %v1058, 5
    %v1160 = vpop.permute.xlu0 %1159
    %1161 = vrot.lane.b32.xlu0 %v1059, 5
    %v1162 = vpop.permute.xlu0 %1161
    %1163 = vrot.lane.b32.xlu0 %v1060, 5
    %v1164 = vpop.permute.xlu0 %1163
    %1181 = vrot.lane.b32.xlu0 %v1093, 10
    %v1182 = vpop.permute.xlu0 %1181
    %1183 = vrot.lane.b32.xlu0 %v1094, 10
    %v1184 = vpop.permute.xlu0 %1183
    %1185 = vrot.lane.b32.xlu0 %v1095, 10
    %v1186 = vpop.permute.xlu0 %1185
    %1187 = vrot.lane.b32.xlu0 %v1096, 10
    %v1188 = vpop.permute.xlu0 %1187
    %1189 = vrot.lane.b32.xlu0 %v1097, 10
    %v1190 = vpop.permute.xlu0 %1189
    %1191 = vrot.lane.b32.xlu0 %v1098, 10
    %v1192 = vpop.permute.xlu0 %1191
    %1193 = vrot.lane.b32.xlu0 %v1099, 10
    %v1194 = vpop.permute.xlu0 %1193
    %1195 = vrot.lane.b32.xlu0 %v1100, 10
    %v1196 = vpop.permute.xlu0 %1195
    %1213 = vrot.lane.b32.xlu0 %v1133, 15
    %v1214 = vpop.permute.xlu0 %1213
    %1215 = vrot.lane.b32.xlu0 %v1134, 15
    %v1216 = vpop.permute.xlu0 %1215
    %1217 = vrot.lane.b32.xlu0 %v1135, 15
    %v1218 = vpop.permute.xlu0 %1217
    %1219 = vrot.lane.b32.xlu0 %v1136, 15
    %v1220 = vpop.permute.xlu0 %1219
    %1221 = vrot.lane.b32.xlu0 %v1137, 15
    %v1222 = vpop.permute.xlu0 %1221
    %1223 = vrot.lane.b32.xlu0 %v1138, 15
    %v1224 = vpop.permute.xlu0 %1223
    %1225 = vrot.lane.b32.xlu0 %v1139, 15
    %v1226 = vpop.permute.xlu0 %1225
    %1227 = vrot.lane.b32.xlu0 %v1140, 15
    %v1228 = vpop.permute.xlu0 %1227
    %vm1237 = vcmask 39936
    %v1238 = vsel %vm1237, %v1013, %v1150
    %v1239 = vsel %vm1237, %v1014, %v1152
    %v1240 = vsel %vm1237, %v1015, %v1154
    %v1241 = vsel %vm1237, %v1016, %v1156
    %v1242 = vsel %vm1237, %v1017, %v1158
    %v1243 = vsel %vm1237, %v1018, %v1160
    %v1244 = vsel %vm1237, %v1019, %v1162
    %v1245 = vsel %vm1237, %v1020, %v1164
    %vm1246 = vcmask 80896
    %v1247 = vsel %vm1246, %v1238, %v1182
    %v1248 = vsel %vm1246, %v1239, %v1184
    %v1249 = vsel %vm1246, %v1240, %v1186
    %v1250 = vsel %vm1246, %v1241, %v1188
    %v1251 = vsel %vm1246, %v1242, %v1190
    %v1252 = vsel %vm1246, %v1243, %v1192
    %v1253 = vsel %vm1246, %v1244, %v1194
    %v1254 = vsel %vm1246, %v1245, %v1196
    %vm1255 = vcmask 121856
    %v1256 = vsel %vm1255, %v1247, %v1214
    %v1257 = vsel %vm1255, %v1248, %v1216
    %v1258 = vsel %vm1255, %v1249, %v1218
    %v1259 = vsel %vm1255, %v1250, %v1220
    %v1260 = vsel %vm1255, %v1251, %v1222
    %v1261 = vsel %vm1255, %v1252, %v1224
    %v1262 = vsel %vm1255, %v1253, %v1226
    %v1263 = vsel %vm1255, %v1254, %v1228
    %vm1264 = vcmask 162816
    %v1265 = vsel %vm1264, %v1256, 0.0
    %v1266 = vrot.slane %v1265, 4
    %v1267 = vadd.f32 %v1265, %v1266
    %v1268 = vrot.slane %v1267, 2
    %v1269 = vadd.f32 %v1267, %v1268
    %v1270 = vrot.slane %v1269, 1
    %v1271 = vadd.f32 %v1269, %v1270
    %v1272 = vsel %vm1264, %v1257, 0.0
    %v1273 = vrot.slane %v1272, 4
    %v1274 = vadd.f32 %v1272, %v1273
    %v1275 = vrot.slane %v1274, 2
    %v1276 = vadd.f32 %v1274, %v1275
    %v1277 = vrot.slane %v1276, 1
    %v1278 = vadd.f32 %v1276, %v1277
    %v1279 = vsel %vm1264, %v1258, 0.0
    %v1280 = vrot.slane %v1279, 4
    %v1281 = vadd.f32 %v1279, %v1280
    %v1282 = vrot.slane %v1281, 2
    %v1283 = vadd.f32 %v1281, %v1282
    %v1284 = vrot.slane %v1283, 1
    %v1285 = vadd.f32 %v1283, %v1284
    %v1286 = vsel %vm1264, %v1259, 0.0
    %v1287 = vrot.slane %v1286, 4
    %v1288 = vadd.f32 %v1286, %v1287
    %v1289 = vrot.slane %v1288, 2
    %v1290 = vadd.f32 %v1288, %v1289
    %v1291 = vrot.slane %v1290, 1
    %v1292 = vadd.f32 %v1290, %v1291
    %v1293 = vsel %vm1264, %v1260, 0.0
    %v1294 = vrot.slane %v1293, 4
    %v1295 = vadd.f32 %v1293, %v1294
    %v1296 = vrot.slane %v1295, 2
    %v1297 = vadd.f32 %v1295, %v1296
    %v1298 = vrot.slane %v1297, 1
    %v1299 = vadd.f32 %v1297, %v1298
    %v1300 = vsel %vm1264, %v1261, 0.0
    %v1301 = vrot.slane %v1300, 4
    %v1302 = vadd.f32 %v1300, %v1301
    %v1303 = vrot.slane %v1302, 2
    %v1304 = vadd.f32 %v1302, %v1303
    %v1305 = vrot.slane %v1304, 1
    %v1306 = vadd.f32 %v1304, %v1305
    %v1307 = vsel %vm1264, %v1262, 0.0
    %v1308 = vrot.slane %v1307, 4
    %v1309 = vadd.f32 %v1307, %v1308
    %v1310 = vrot.slane %v1309, 2
    %v1311 = vadd.f32 %v1309, %v1310
    %v1312 = vrot.slane %v1311, 1
    %v1313 = vadd.f32 %v1311, %v1312
    %v1314 = vsel %vm1264, %v1263, 0.0
    %v1315 = vrot.slane %v1314, 4
    %v1316 = vadd.f32 %v1314, %v1315
    %v1317 = vrot.slane %v1316, 2
    %v1318 = vadd.f32 %v1316, %v1317
    %v1319 = vrot.slane %v1318, 1
    %v1320 = vadd.f32 %v1318, %v1319
    %vm1329 = vcmask 1041409
    %v1330 = vsel %vm1329, %v1278, %v1271
    %vm1331 = vcmask 1042434
    %v1332 = vsel %vm1331, %v1285, %v1330
    %vm1333 = vcmask 1043459
    %v1334 = vsel %vm1333, %v1292, %v1332
    %vm1335 = vcmask 1044484
    %v1336 = vsel %vm1335, %v1299, %v1334
    %vm1337 = vcmask 1045509
    %v1338 = vsel %vm1337, %v1306, %v1336
    %vm1339 = vcmask 1046534
    %v1340 = vsel %vm1339, %v1313, %v1338
    %vm1341 = vcmask 1047559
    %v1342 = vsel %vm1341, %v1320, %v1340
    %1344 = vst.msk [vmem:[#allocation2] sm:$0xff] %vm1264, %v1342
    // Predicated region
    $region30: #{tpu_custom_call.1} parent=1 // pred_check
      _
    $region31: #{tpu_custom_call.1} parent=1 // pred_check_branch
      %1346 = sbr.rel (0) target = $region33
    $region32: #{tpu_custom_call.1} parent=1 // pred_region
      %s1348 = ssub.s32 128, 128
      %1349 = vsyncadd [#allocation3], %s1348
      %s1351 = sshll.u32 [#allocation2], 4
      %s1352 = int_to_ptr.vmem [resolvable:$true] %s1351
      %1354 = dma.vmem_to_hbm [thread:$0]  %s1352, 128, %s7, [#allocation3]
    $region33: #{tpu_custom_call.1} parent=1 // pred_fallthru
      _
    // Predicated region
    $region34: #{tpu_custom_call.1} parent=1 // pred_check
      _
    $region35: #{tpu_custom_call.1} parent=1 // pred_check_branch
      %1356 = sbr.rel (0) target = $region37
    $region36: #{tpu_custom_call.1} parent=1 // pred_region
      %1357 = dma.done [#allocation3], 128
    $region37: #{tpu_custom_call.1} parent=1 // pred_fallthru
      _
    %1358 = vsyncpa [#allocation3], 1

</llo_original>
